<compile_context>
chip_gen: v5e
topology: v5e:2x2
jax: 0.10.0
libtpu: 0.0.40
codegen_flags: <defaults>
</compile_context>

<pallas_src>
import functools

import jax
import jax.numpy as jnp
from jax.experimental import pallas as pl
from jax.experimental.pallas import tpu as pltpu

_LANE = 128


def _simple_net_kernel(w_ref, b_ref, x_ref, o_ref):
    # w_ref: SMEM (3,) f32, b_ref: SMEM (1,) f32
    # x_ref: VMEM (3, TILE_B) f32, o_ref: VMEM (1, TILE_B) f32
    x = x_ref[...]                                   # (3, TILE_B)
    # Linear(3 -> 1): pure VPU scalar*vector FMAs, lane-dense along the batch.
    y = (w_ref[0] * x[0:1, :]
         + w_ref[1] * x[1:2, :]
         + w_ref[2] * x[2:3, :]
         + b_ref[0])                                 # (1, TILE_B), f32
    # 0.5 * (sigmoid(y) + 0.5); the exp lands on the EUP (otherwise-idle slot).
    o_ref[...] = 0.5 * (jax.nn.sigmoid(y) + 0.5)


@functools.partial(jax.jit, static_argnames=("tile_b",))
def simple_network_forward(x, weight, bias, *, tile_b=1024):
    """x: (B, 3) f32, weight: (1, 3) f32, bias: (1,) f32 -> (B, 1) f32."""
    B = x.shape[0]
    # Lane-multiple tile width, clamped to the (lane-padded) batch.
    b_lanes = pl.cdiv(B, _LANE) * _LANE
    tb = max(_LANE, min(int(tile_b), b_lanes))
    b_pad = pl.cdiv(B, tb) * tb

    # Layout plumbing in the wrapper: feature-major, lane-dense, zero-padded.
    xt = jnp.transpose(x.astype(jnp.float32))        # (3, B)
    if b_pad != B:
        xt = jnp.pad(xt, ((0, 0), (0, b_pad - B)))
    w_flat = weight.reshape(3).astype(jnp.float32)
    b_flat = bias.reshape(1).astype(jnp.float32)

    out = pl.pallas_call(
        _simple_net_kernel,
        out_shape=jax.ShapeDtypeStruct((1, b_pad), jnp.float32),
        grid=(b_pad // tb,),
        in_specs=[
            pl.BlockSpec(memory_space=pltpu.MemorySpace.SMEM),   # weight (3,)
            pl.BlockSpec(memory_space=pltpu.MemorySpace.SMEM),   # bias (1,)
            pl.BlockSpec((3, tb), lambda i: (0, i)),             # x tile (3, tb)
        ],
        out_specs=pl.BlockSpec((1, tb), lambda i: (0, i)),
        compiler_params=pltpu.CompilerParams(
            dimension_semantics=("parallel",),
        ),
    )(w_flat, b_flat, xt)

    # Back to the PyTorch output shape (B, 1).
    return out[0, :B].reshape(B, 1)


def init_params(key):
    # Mimic PyTorch nn.Linear(3, 1) default init: U(-1/sqrt(3), 1/sqrt(3)).
    kw, kb = jax.random.split(key)
    bound = 1.0 / jnp.sqrt(3.0)
    weight = jax.random.uniform(kw, (1, 3), jnp.float32, -bound, bound)
    bias = jax.random.uniform(kb, (1,), jnp.float32, -bound, bound)
    return weight, bias


def _reference(x, weight, bias):
    return 0.5 * (jax.nn.sigmoid(x @ weight.T + bias) + 0.5)


if __name__ == "__main__":
    key = jax.random.PRNGKey(0)
    kx1, kx2, kp = jax.random.split(key, 3)
    weight, bias = init_params(kp)

    # Small batch (single grid step; module-consistent shape (B, 3)).
    B1 = 8
    x1 = jax.random.normal(kx1, (B1, 3), jnp.float32)
    out1 = simple_network_forward(x1, weight, bias)
    jax.block_until_ready(out1)
    ref1 = _reference(x1, weight, bias)
    assert out1.shape == (B1, 1)
    assert jnp.allclose(out1, ref1, atol=1e-5, rtol=1e-5)

    # Ragged batch exercising the multi-step grid + padding path.
    B2 = 300
    x2 = jax.random.normal(kx2, (B2, 3), jnp.float32)
    out2 = simple_network_forward(x2, weight, bias, tile_b=128)
    jax.block_until_ready(out2)
    ref2 = _reference(x2, weight, bias)
    assert out2.shape == (B2, 1)
    assert jnp.allclose(out2, ref2, atol=1e-5, rtol=1e-5)

    print("KERNEL_OK")
</pallas_src>

<mosaic_0001>
module attributes {stable_mosaic.version = 11 : i64} {
  func.func @_simple_net_kernel(%arg0: i32, %arg1: memref<3xf32, #tpu.memory_space<smem>>, %arg2: memref<1xf32, #tpu.memory_space<smem>>, %arg3: memref<3x128xf32, #tpu.memory_space<vmem>>, %arg4: memref<1x128xf32, #tpu.memory_space<vmem>>) attributes {dimension_semantics = [#tpu.dimension_semantics<parallel>], iteration_bounds = array<i64: 1>, scalar_prefetch = 0 : i64, scratch_operands = 0 : i64, tpu.core_type = #tpu.core_type<tc>, window_params = [{transform_indices = @transform_0, window_bounds = array<i64: 3>}, {transform_indices = @transform_1, window_bounds = array<i64: 1>}, {transform_indices = @transform_2, window_bounds = array<i64: 3, 128>}, {transform_indices = @transform_3, window_bounds = array<i64: 1, 128>}]} {
    %c0 = arith.constant 0 : index
    %c0_0 = arith.constant 0 : index
    %0 = vector.load %arg3[%c0, %c0_0] : memref<3x128xf32, #tpu.memory_space<vmem>>, vector<3x128xf32>
    %c0_1 = arith.constant 0 : index
    %1 = memref.load %arg1[%c0_1] : memref<3xf32, #tpu.memory_space<smem>>
    %2 = vector.extract_strided_slice %0 {offsets = [0, 0], sizes = [1, 128], strides = [1, 1]} : vector<3x128xf32> to vector<1x128xf32>
    %3 = vector.broadcast %1 : f32 to vector<1x128xf32>
    %4 = arith.mulf %3, %2 : vector<1x128xf32>
    %c1 = arith.constant 1 : index
    %5 = memref.load %arg1[%c1] : memref<3xf32, #tpu.memory_space<smem>>
    %6 = vector.extract_strided_slice %0 {offsets = [1, 0], sizes = [1, 128], strides = [1, 1]} : vector<3x128xf32> to vector<1x128xf32>
    %7 = vector.broadcast %5 : f32 to vector<1x128xf32>
    %8 = arith.mulf %7, %6 : vector<1x128xf32>
    %9 = arith.addf %4, %8 : vector<1x128xf32>
    %c2 = arith.constant 2 : index
    %10 = memref.load %arg1[%c2] : memref<3xf32, #tpu.memory_space<smem>>
    %11 = vector.extract_strided_slice %0 {offsets = [2, 0], sizes = [1, 128], strides = [1, 1]} : vector<3x128xf32> to vector<1x128xf32>
    %12 = vector.broadcast %10 : f32 to vector<1x128xf32>
    %13 = arith.mulf %12, %11 : vector<1x128xf32>
    %14 = arith.addf %9, %13 : vector<1x128xf32>
    %c0_2 = arith.constant 0 : index
    %15 = memref.load %arg2[%c0_2] : memref<1xf32, #tpu.memory_space<smem>>
    %16 = vector.broadcast %15 : f32 to vector<1x128xf32>
    %17 = arith.addf %14, %16 : vector<1x128xf32>
    %18 = arith.negf %17 : vector<1x128xf32>
    %19 = math.exp %18 : vector<1x128xf32>
    %cst = arith.constant 1.000000e+00 : f32
    %20 = vector.broadcast %cst : f32 to vector<1x128xf32>
    %21 = arith.addf %20, %19 : vector<1x128xf32>
    %22 = arith.divf %20, %21 : vector<1x128xf32>
    %cst_3 = arith.constant 5.000000e-01 : f32
    %23 = vector.broadcast %cst_3 : f32 to vector<1x128xf32>
    %24 = arith.addf %22, %23 : vector<1x128xf32>
    %cst_4 = arith.constant 5.000000e-01 : f32
    %25 = vector.broadcast %cst_4 : f32 to vector<1x128xf32>
    %26 = arith.mulf %25, %24 : vector<1x128xf32>
    %c0_5 = arith.constant 0 : index
    %c0_6 = arith.constant 0 : index
    %27 = vector.load %arg4[%c0_5, %c0_6] : memref<1x128xf32, #tpu.memory_space<vmem>>, vector<1x128xf32>
    tpu.vector_store %arg4[%c0_5, %c0_6], %26 {strides = array<i32>} : memref<1x128xf32, #tpu.memory_space<vmem>>, vector<1x128xf32>,
    return
  }
  func.func @transform_0(%arg0: i32) -> i32 {
    %c0_i32 = arith.constant 0 : i32
    %c0_i32_0 = arith.constant 0 : i32
    return %c0_i32 : i32
  }
  func.func @transform_1(%arg0: i32) -> i32 {
    %c0_i32 = arith.constant 0 : i32
    %c0_i32_0 = arith.constant 0 : i32
    return %c0_i32 : i32
  }
  func.func @transform_2(%arg0: i32) -> (i32, i32) {
    %c0_i32 = arith.constant 0 : i32
    %c0_i32_0 = arith.constant 0 : i32
    return %c0_i32, %arg0 : i32, i32
  }
  func.func @transform_3(%arg0: i32) -> (i32, i32) {
    %c0_i32 = arith.constant 0 : i32
    %c0_i32_0 = arith.constant 0 : i32
    return %c0_i32, %arg0 : i32, i32
  }
}

</mosaic_0001>

<llo_original>
// kernel: simple_network_forward.1
$region0: #{simple_network_forward.1}
  #allocation0 [shape = 'u32[]', space=smem, size = 0x4, offset = 0x4, fixed_abs, tag = 'smem constant byte address 0x4 - core index']
  #allocation1 [shape = 'u32[72,128]{1,0:T(1,128)}', space=vmem, size = 0x9000, scoped, tag = 'internal scratch']
  #allocation2 [shape = 'f32[1]{0:T(128)S(6)}', space=smem, size = 0x200, scoped, tag = 'scoped memory for simple_network_forward.1']
  %s0 = inlined_call_operand.vmem [shape: f32[3], index: 0, kind: input, shape index: {}]
  %s1 = inlined_call_operand.<no memory space> [shape: f32[1], index: 1, kind: input, shape index: {}]
  %s2 = inlined_call_operand.vmem [shape: f32[3,128], index: 2, kind: input, shape index: {}]
  %s3 = inlined_call_operand.vmem [shape: f32[1,128], index: 3, kind: output, shape index: {}]
  %s4 = sld [smem:[#allocation0]]
  $region26: #{simple_network_forward.1} parent=0
    _
  %s6 = ssub.s32 1, %s4
  %s7 = scalar_select 0, %s6, %s4
  %8 = sst [smem:[#allocation2]] %s1
  $region1: #{simple_network_forward.1} parent=0
    #allocation3 [shape = 'u8[512]{0}', space=smem, size = 0x200, scoped, tag = 'input window, operand 0, single buffered']
    #allocation4 [shape = 's32[1]{0}', space=sflag, size = 0x4, scoped, tag = 'scoped memory for simple_network_forward.1']
    %9 = vsyncpa [#allocation4], 0
    // Predicated region
    $region2: #{simple_network_forward.1} parent=1 // pred_check
      _
    $region3: #{simple_network_forward.1} parent=1 // pred_check_branch
      %11 = sbr.rel (0) target = $region5
    $region4: #{simple_network_forward.1} parent=1 // pred_region
      %13 = vsyncadd [#allocation4], 0
      %s15 = sshll.u32 %s0, 4
      %s16 = int_to_ptr.vmem [resolvable:$true] %s15
      %18 = dma.vmem_to_smem %s16, 16, [#allocation3], [#allocation4]
    $region5: #{simple_network_forward.1} parent=1 // pred_fallthru
      _
    // Predicated region
    $region6: #{simple_network_forward.1} parent=1 // pred_check
      _
    $region7: #{simple_network_forward.1} parent=1 // pred_check_branch
      %20 = sbr.rel (0) target = $region9
    $region8: #{simple_network_forward.1} parent=1 // pred_region
      _
    $region9: #{simple_network_forward.1} parent=1 // pred_fallthru
      _
    // Predicated region
    $region10: #{simple_network_forward.1} parent=1 // pred_check
      _
    $region11: #{simple_network_forward.1} parent=1 // pred_check_branch
      %22 = sbr.rel (0) target = $region13
    $region12: #{simple_network_forward.1} parent=1 // pred_region
      _
    $region13: #{simple_network_forward.1} parent=1 // pred_fallthru
      _
    // Predicated region
    $region14: #{simple_network_forward.1} parent=1 // pred_check
      _
    $region15: #{simple_network_forward.1} parent=1 // pred_check_branch
      %24 = sbr.rel (0) target = $region17
    $region16: #{simple_network_forward.1} parent=1 // pred_region
      %26 = dma.done [#allocation4], 16
    $region17: #{simple_network_forward.1} parent=1 // pred_fallthru
      _
    %27 = sfence
    %v28 = vld [vmem:[%s2] sm:$0x7]
    %s29 = sld [smem:[#allocation3]]
    %v30 = vstv %s29
    %v31 = vmul.f32 %v30, %v28
    %s32 = sld [smem:[#allocation3 + $0x1]]
    %v33 = vstv %s32
    %v34 = vmul.f32 %v33, %v28
    %v36 = vrot.slane %v34, 1
    %v38 = vadd.f32 %v31, %v36
    %s39 = sld [smem:[#allocation3 + $0x2]]
    %v40 = vstv %s39
    %v41 = vmul.f32 %v40, %v28
    %v43 = vrot.slane %v41, 2
    %v45 = vadd.f32 %v38, %v43
    %s46 = sld [smem:[#allocation2]]
    %v47 = vstv %s46
    %v48 = vadd.f32 %v45, %v47
    %v49 = vxor.u32 %v48, 2147483648
    %v50 = vmul.f32 %v49, 1.442695
    %v51 = vpow.pop %v50
    %v52 = vadd.f32 %v51, 1.0
    %v53 = vrcp.pop %v52
    %v54 = vmul.f32 %v52, %v53
    %v55 = vsub.f32 1.0, %v54
    %v56 = vmul.f32 %v53, %v55
    %v57 = vadd.f32 %v53, %v56
    %vm58 = vweird.f32 %v52
    %vm59 = vweird.f32 %v53
    %vm60 = vmor %vm58, %vm59
    %v61 = vsel %vm60, %v53, %v57
    %v62 = vand.u32 2147483647, %v52
    %vm63 = vcmp.eq.f32.partialorder %v62, 8.507059e+37
    %v64 = vand.u32 %v52, 2147483648
    %v65 = vor.u32 1.1754944e-38, %v64
    %v66 = vsel %vm63, %v65, %v61
    %v67 = vmul.f32 1.0, %v66
    %v68 = vadd.f32 %v67, 0.5
    %v69 = vmul.f32 %v68, 0.5
    %70 = vst [vmem:[%s3] sm:$0x1] %v69
    // Predicated region
    $region18: #{simple_network_forward.1} parent=1 // pred_check
      _
    $region19: #{simple_network_forward.1} parent=1 // pred_check_branch
      %72 = sbr.rel (0) target = $region21
    $region20: #{simple_network_forward.1} parent=1 // pred_region
      _
    $region21: #{simple_network_forward.1} parent=1 // pred_fallthru
      _
    // Predicated region
    $region22: #{simple_network_forward.1} parent=1 // pred_check
      _
    $region23: #{simple_network_forward.1} parent=1 // pred_check_branch
      %74 = sbr.rel (0) target = $region25
    $region24: #{simple_network_forward.1} parent=1 // pred_region
      _
    $region25: #{simple_network_forward.1} parent=1 // pred_fallthru
      _
    %75 = vsyncpa [#allocation4], 1

</llo_original>
